<compile_context>
chip_gen: v6e
topology: v6e:2x2x1
jax: 0.10.0
libtpu: 0.0.40
codegen_flags: <defaults>
</compile_context>

<pallas_src>
import math

import jax
import jax.numpy as jnp
from jax.experimental import pallas as pl
from jax.experimental.pallas import tpu as pltpu


def _round_up(x, m):
    return ((x + m - 1) // m) * m


# ---------------------------------------------------------------------------
# One-time parameter packing (init time, NOT per forward call).
#
#   w_packed (bf16, shape (IPAD + 2*LP, LP)):
#     rows [0,        IPAD)      : W1^T  (n_input, F)  zero-padded   (VPU layer)
#     rows [IPAD,     IPAD+LP)   : W2^T  padded to (LP, LP)          (MXU)
#     rows [IPAD+LP,  IPAD+2LP)  : W3^T  padded to (LP, LP)          (MXU)
#   b_packed (f32, shape (8, LP)): row0 = b1, row1 = b2, row2 = b3 (padded).
#
# IPAD = round_up(n_input, 16) keeps the bf16 (16,128) sublane tiling of the
# W2 / W3 slabs aligned.  Zero padding is numerically exact: padded rows and
# lanes contribute exactly 0 through every matmul and ReLU.
# ---------------------------------------------------------------------------
def pack_params(params, n_state, n_action, n_features, n_output):
    n_input = n_state + n_action
    LP = _round_up(max(n_features, n_output, 1), 128)
    IPAD = _round_up(n_input, 16)
    RW = IPAD + 2 * LP

    w1_t = params["w1"].T.astype(jnp.float32)  # (n_input, F); torch layout is (out, in)
    w2_t = params["w2"].T.astype(jnp.float32)  # (F, F)
    w3_t = params["w3"].T.astype(jnp.float32)  # (F, n_output)

    w = jnp.zeros((RW, LP), jnp.float32)
    w = w.at[0:n_input, 0:n_features].set(w1_t)
    w = w.at[IPAD:IPAD + n_features, 0:n_features].set(w2_t)
    w = w.at[IPAD + LP:IPAD + LP + n_features, 0:n_output].set(w3_t)
    w_packed = w.astype(jnp.bfloat16)

    b = jnp.zeros((8, LP), jnp.float32)
    b = b.at[0, 0:n_features].set(params["b1"].astype(jnp.float32))
    b = b.at[1, 0:n_features].set(params["b2"].astype(jnp.float32))
    b = b.at[2, 0:n_output].set(params["b3"].astype(jnp.float32))
    return w_packed, b


# ---------------------------------------------------------------------------
# Forward pass: one pallas_call, whole MLP fused, batch-tiled grid.
# ---------------------------------------------------------------------------
def critic_forward(state, action, w_packed, b_packed, n_output):
    state = state.astype(jnp.float32)    # mirrors state.float() / action.float()
    action = action.astype(jnp.float32)

    B, n_state = state.shape
    _, n_action = action.shape
    n_input = n_state + n_action
    RW, LP = w_packed.shape
    IPAD = _round_up(n_input, 16)

    # Batch tiling: single block on the small-B latency path; 2048-row tiles
    # (bounded VMEM, >=2 steps -> both v7x TCs) for large batches.  Pad the
    # batch so every tile is full (no OOB reads/writes).
    Bp = _round_up(B, 8)
    tb = min(Bp, 2048)
    Bp = _round_up(Bp, tb)
    if Bp != B:
        pad = Bp - B
        state = jnp.pad(state, ((0, pad), (0, 0)))
        action = jnp.pad(action, ((0, pad), (0, 0)))
    grid = (Bp // tb,)

    def kernel(s_ref, a_ref, w_ref, b_ref, q_ref):
        s = s_ref[...]                              # (tb, n_state)  f32
        a = a_ref[...]                              # (tb, n_action) f32

        b1 = b_ref[0:1, :]                          # (1, LP) f32
        b2 = b_ref[1:2, :]
        b3 = b_ref[2:3, :]

        # ---- Layer 1 on the VPU: K = n_input is tiny (3 + 1), not worth two
        # MXU pushes.  One aligned (IPAD, LP) slab load + n_input broadcast
        # FMAs; padded rows are never touched.
        w1 = w_ref[0:IPAD, :].astype(jnp.float32)   # (IPAD, LP), tile-aligned
        h1 = jnp.broadcast_to(b1, (tb, LP))
        for j in range(n_state):
            h1 = h1 + s[:, j:j + 1] * w1[j:j + 1, :]
        for j in range(n_action):
            h1 = h1 + a[:, j:j + 1] * w1[n_state + j:n_state + j + 1, :]
        h1 = jnp.maximum(h1, 0.0)

        # ---- Layers 2 & 3 on the MXU: full (LP, LP) tile-aligned bf16 slabs,
        # f32 accumulation.
        w2 = w_ref[IPAD:IPAD + LP, :]               # (LP, LP) bf16
        w3 = w_ref[IPAD + LP:IPAD + 2 * LP, :]      # (LP, LP) bf16

        h2 = jnp.dot(h1.astype(jnp.bfloat16), w2,
                     preferred_element_type=jnp.float32) + b2
        h2 = jnp.maximum(h2, 0.0)

        q = jnp.dot(h2.astype(jnp.bfloat16), w3,
                    preferred_element_type=jnp.float32) + b3

        # Narrow HBM writeback: only the n_output meaningful lanes.
        q_ref[...] = q[:, :n_output].astype(q_ref.dtype)

    cost = pl.CostEstimate(
        flops=2 * Bp * LP * (n_input + 2 * LP),
        transcendentals=0,
        bytes_accessed=(4 * (state.size + action.size)
                        + 2 * w_packed.size + 4 * b_packed.size
                        + 4 * Bp * n_output),
    )

    q = pl.pallas_call(
        kernel,
        out_shape=jax.ShapeDtypeStruct((Bp, n_output), jnp.float32),
        grid=grid,
        in_specs=[
            pl.BlockSpec((tb, n_state), lambda i: (i, 0)),
            pl.BlockSpec((tb, n_action), lambda i: (i, 0)),
            # Grid-invariant blocks (index (0,0) for all i): the pipeline
            # skips the DMA when the block index is unchanged, so params are
            # read from HBM once per call.
            pl.BlockSpec((RW, LP), lambda i: (0, 0)),
            pl.BlockSpec((8, LP), lambda i: (0, 0)),
        ],
        out_specs=pl.BlockSpec((tb, n_output), lambda i: (i, 0)),
        compiler_params=pltpu.CompilerParams(
            dimension_semantics=("parallel",)),
        cost_estimate=cost,
    )(state, action, w_packed, b_packed)

    # torch.squeeze removes all size-1 dims (B==1 & n_output==1 -> 0-d scalar,
    # exactly as in the PyTorch module).
    return jnp.squeeze(q[:B])


# ---------------------------------------------------------------------------
# Initialization matching the PyTorch module.
# ---------------------------------------------------------------------------
def xavier_uniform(key, shape, gain):
    fan_out, fan_in = shape  # PyTorch Linear weight is (out, in)
    a = gain * math.sqrt(6.0 / (fan_in + fan_out))
    return jax.random.uniform(key, shape, jnp.float32, minval=-a, maxval=a)


def init_params(key, n_input, n_features, n_output):
    ks = jax.random.split(key, 6)
    gain_relu = math.sqrt(2.0)   # nn.init.calculate_gain('relu')
    gain_lin = 1.0               # nn.init.calculate_gain('linear')

    def bias(k, fan_in, size):   # default nn.Linear bias init
        bound = 1.0 / math.sqrt(fan_in)
        return jax.random.uniform(k, (size,), jnp.float32, minval=-bound, maxval=bound)

    return {
        "w1": xavier_uniform(ks[0], (n_features, n_input), gain_relu),
        "b1": bias(ks[1], n_input, n_features),
        "w2": xavier_uniform(ks[2], (n_features, n_features), gain_relu),
        "b2": bias(ks[3], n_features, n_features),
        "w3": xavier_uniform(ks[4], (n_output, n_features), gain_lin),
        "b3": bias(ks[5], n_features, n_output),
    }


if __name__ == "__main__":
    # Pendulum-like shapes: state dim 3, action dim 1 -> n_input = 4; Q dim 1.
    B = 8
    n_state, n_action = 3, 1
    n_input = n_state + n_action
    n_features = 32
    n_output = 1

    key = jax.random.PRNGKey(0)
    k_state, k_action, k_params = jax.random.split(key, 3)

    state = jax.random.normal(k_state, (B, n_state), jnp.float32)
    action = jax.random.normal(k_action, (B, n_action), jnp.float32)

    params = init_params(k_params, n_input, n_features, n_output)
    # Pack once at init time (pre-transposed, pre-padded, bf16 weights).
    w_packed, b_packed = pack_params(params, n_state, n_action, n_features, n_output)
    w_packed = jax.block_until_ready(w_packed)

    fwd = jax.jit(critic_forward, static_argnums=(4,))
    q = fwd(state, action, w_packed, b_packed, n_output)
    q = jax.block_until_ready(q)

    # Pure-JAX f32 reference (original PyTorch-layout params).  bf16 weight
    # storage in the kernel bounds agreement to ~bf16 precision.
    x = jnp.concatenate([state, action], axis=1)
    h1 = jnp.maximum(x @ params["w1"].T + params["b1"], 0.0)
    h2 = jnp.maximum(h1 @ params["w2"].T + params["b2"], 0.0)
    q_ref = jnp.squeeze(h2 @ params["w3"].T + params["b3"])

    assert q.shape == (B,), q.shape
    assert jnp.allclose(q, q_ref, rtol=5e-2, atol=5e-2), (q, q_ref)

    print("KERNEL_OK")
</pallas_src>

<mosaic_0001>
module attributes {stable_mosaic.version = 11 : i64} {
  func.func @kernel(%arg0: i32, %arg1: memref<8x3xf32, #tpu.memory_space<vmem>>, %arg2: memref<8x1xf32, #tpu.memory_space<vmem>>, %arg3: memref<272x128xbf16, #tpu.memory_space<vmem>>, %arg4: memref<8x128xf32, #tpu.memory_space<vmem>>, %arg5: memref<8x1xf32, #tpu.memory_space<vmem>>) attributes {dimension_semantics = [#tpu.dimension_semantics<parallel>], iteration_bounds = array<i64: 1>, scalar_prefetch = 0 : i64, scratch_operands = 0 : i64, tpu.core_type = #tpu.core_type<tc>, window_params = [{transform_indices = @transform_0, window_bounds = array<i64: 8, 3>}, {transform_indices = @transform_1, window_bounds = array<i64: 8, 1>}, {pipeline_mode = #tpu.pipeline_mode<synchronous>, transform_indices = @transform_2, window_bounds = array<i64: 272, 128>}, {pipeline_mode = #tpu.pipeline_mode<synchronous>, transform_indices = @transform_3, window_bounds = array<i64: 8, 128>}, {transform_indices = @transform_4, window_bounds = array<i64: 8, 1>}]} {
    %c0 = arith.constant 0 : index
    %c0_0 = arith.constant 0 : index
    %0 = vector.load %arg1[%c0, %c0_0] : memref<8x3xf32, #tpu.memory_space<vmem>>, vector<8x3xf32>
    %c0_1 = arith.constant 0 : index
    %c0_2 = arith.constant 0 : index
    %1 = vector.load %arg2[%c0_1, %c0_2] : memref<8x1xf32, #tpu.memory_space<vmem>>, vector<8x1xf32>
    %c0_3 = arith.constant 0 : index
    %c0_4 = arith.constant 0 : index
    %2 = vector.load %arg4[%c0_3, %c0_4] : memref<8x128xf32, #tpu.memory_space<vmem>>, vector<1x128xf32>
    %c1 = arith.constant 1 : index
    %c0_5 = arith.constant 0 : index
    %3 = vector.load %arg4[%c1, %c0_5] : memref<8x128xf32, #tpu.memory_space<vmem>>, vector<1x128xf32>
    %c2 = arith.constant 2 : index
    %c0_6 = arith.constant 0 : index
    %4 = vector.load %arg4[%c2, %c0_6] : memref<8x128xf32, #tpu.memory_space<vmem>>, vector<1x128xf32>
    %c0_7 = arith.constant 0 : index
    %c0_8 = arith.constant 0 : index
    %5 = vector.load %arg3[%c0_7, %c0_8] : memref<272x128xbf16, #tpu.memory_space<vmem>>, vector<16x128xbf16>
    %6 = arith.extf %5 : vector<16x128xbf16> to vector<16x128xf32>
    %7 = vector.shape_cast %2 : vector<1x128xf32> to vector<1x128xf32>
    %8 = vector.broadcast %7 : vector<1x128xf32> to vector<8x128xf32>
    %9 = vector.extract_strided_slice %0 {offsets = [0, 0], sizes = [8, 1], strides = [1, 1]} : vector<8x3xf32> to vector<8x1xf32>
    %10 = vector.extract_strided_slice %6 {offsets = [0, 0], sizes = [1, 128], strides = [1, 1]} : vector<16x128xf32> to vector<1x128xf32>
    %11 = vector.broadcast %9 : vector<8x1xf32> to vector<8x128xf32>
    %12 = vector.broadcast %10 : vector<1x128xf32> to vector<8x128xf32>
    %13 = arith.mulf %11, %12 : vector<8x128xf32>
    %14 = arith.addf %8, %13 : vector<8x128xf32>
    %15 = vector.extract_strided_slice %0 {offsets = [0, 1], sizes = [8, 1], strides = [1, 1]} : vector<8x3xf32> to vector<8x1xf32>
    %16 = vector.extract_strided_slice %6 {offsets = [1, 0], sizes = [1, 128], strides = [1, 1]} : vector<16x128xf32> to vector<1x128xf32>
    %17 = vector.broadcast %15 : vector<8x1xf32> to vector<8x128xf32>
    %18 = vector.broadcast %16 : vector<1x128xf32> to vector<8x128xf32>
    %19 = arith.mulf %17, %18 : vector<8x128xf32>
    %20 = arith.addf %14, %19 : vector<8x128xf32>
    %21 = vector.extract_strided_slice %0 {offsets = [0, 2], sizes = [8, 1], strides = [1, 1]} : vector<8x3xf32> to vector<8x1xf32>
    %22 = vector.extract_strided_slice %6 {offsets = [2, 0], sizes = [1, 128], strides = [1, 1]} : vector<16x128xf32> to vector<1x128xf32>
    %23 = vector.broadcast %21 : vector<8x1xf32> to vector<8x128xf32>
    %24 = vector.broadcast %22 : vector<1x128xf32> to vector<8x128xf32>
    %25 = arith.mulf %23, %24 : vector<8x128xf32>
    %26 = arith.addf %20, %25 : vector<8x128xf32>
    %27 = vector.extract_strided_slice %6 {offsets = [3, 0], sizes = [1, 128], strides = [1, 1]} : vector<16x128xf32> to vector<1x128xf32>
    %28 = vector.broadcast %1 : vector<8x1xf32> to vector<8x128xf32>
    %29 = vector.broadcast %27 : vector<1x128xf32> to vector<8x128xf32>
    %30 = arith.mulf %28, %29 : vector<8x128xf32>
    %31 = arith.addf %26, %30 : vector<8x128xf32>
    %cst = arith.constant 0.000000e+00 : f32
    %32 = vector.broadcast %cst : f32 to vector<8x128xf32>
    %33 = arith.maximumf %31, %32 : vector<8x128xf32>
    %c16 = arith.constant 16 : index
    %c0_9 = arith.constant 0 : index
    %34 = vector.load %arg3[%c16, %c0_9] : memref<272x128xbf16, #tpu.memory_space<vmem>>, vector<128x128xbf16>
    %c144 = arith.constant 144 : index
    %c0_10 = arith.constant 0 : index
    %35 = vector.load %arg3[%c144, %c0_10] : memref<272x128xbf16, #tpu.memory_space<vmem>>, vector<128x128xbf16>
    %36 = arith.truncf %33 : vector<8x128xf32> to vector<8x128xbf16>
    %cst_11 = arith.constant dense<0.000000e+00> : vector<8x128xf32>
    %37 = tpu.matmul %36, %34, %cst_11 {dimension_numbers = #tpu.dot_dimension_numbers<[1], [0], [0], [1], [0, 0, 1, 1], [], []>} : vector<8x128xbf16>, vector<128x128xbf16>, vector<8x128xf32> -> vector<8x128xf32>
    %38 = vector.broadcast %3 : vector<1x128xf32> to vector<8x128xf32>
    %39 = arith.addf %37, %38 : vector<8x128xf32>
    %cst_12 = arith.constant 0.000000e+00 : f32
    %40 = vector.broadcast %cst_12 : f32 to vector<8x128xf32>
    %41 = arith.maximumf %39, %40 : vector<8x128xf32>
    %42 = arith.truncf %41 : vector<8x128xf32> to vector<8x128xbf16>
    %cst_13 = arith.constant dense<0.000000e+00> : vector<8x128xf32>
    %43 = tpu.matmul %42, %35, %cst_13 {dimension_numbers = #tpu.dot_dimension_numbers<[1], [0], [0], [1], [0, 0, 1, 1], [], []>} : vector<8x128xbf16>, vector<128x128xbf16>, vector<8x128xf32> -> vector<8x128xf32>
    %44 = vector.broadcast %4 : vector<1x128xf32> to vector<8x128xf32>
    %45 = arith.addf %43, %44 : vector<8x128xf32>
    %46 = vector.extract_strided_slice %45 {offsets = [0, 0], sizes = [8, 1], strides = [1, 1]} : vector<8x128xf32> to vector<8x1xf32>
    %c0_14 = arith.constant 0 : index
    %c0_15 = arith.constant 0 : index
    %47 = vector.load %arg5[%c0_14, %c0_15] : memref<8x1xf32, #tpu.memory_space<vmem>>, vector<8x1xf32>
    tpu.vector_store %arg5[%c0_14, %c0_15], %46 {strides = array<i32>} : memref<8x1xf32, #tpu.memory_space<vmem>>, vector<8x1xf32>,
    return
  }
  func.func @transform_0(%arg0: i32) -> (i32, i32) {
    %c0_i32 = arith.constant 0 : i32
    %c0_i32_0 = arith.constant 0 : i32
    return %arg0, %c0_i32 : i32, i32
  }
  func.func @transform_1(%arg0: i32) -> (i32, i32) {
    %c0_i32 = arith.constant 0 : i32
    %c0_i32_0 = arith.constant 0 : i32
    return %arg0, %c0_i32 : i32, i32
  }
  func.func @transform_2(%arg0: i32) -> (i32, i32) {
    %c0_i32 = arith.constant 0 : i32
    %c0_i32_0 = arith.constant 0 : i32
    %c0_i32_1 = arith.constant 0 : i32
    return %c0_i32, %c0_i32_0 : i32, i32
  }
  func.func @transform_3(%arg0: i32) -> (i32, i32) {
    %c0_i32 = arith.constant 0 : i32
    %c0_i32_0 = arith.constant 0 : i32
    %c0_i32_1 = arith.constant 0 : i32
    return %c0_i32, %c0_i32_0 : i32, i32
  }
  func.func @transform_4(%arg0: i32) -> (i32, i32) {
    %c0_i32 = arith.constant 0 : i32
    %c0_i32_0 = arith.constant 0 : i32
    return %arg0, %c0_i32 : i32, i32
  }
}

</mosaic_0001>

<llo_original>
// kernel: critic_forward.1
$region0: #{critic_forward.1}
  #allocation0 [shape = 'u32[]', space=smem, size = 0x4, offset = 0x4, fixed_abs, tag = 'smem constant byte address 0x4 - core index']
  #allocation1 [shape = 'u32[144,128]{1,0:T(1,128)}', space=vmem, size = 0x12000, scoped, tag = 'internal scratch']
  %s0 = inlined_call_operand.vmem [shape: f32[8,3], index: 0, kind: input, shape index: {}]
  %s1 = inlined_call_operand.vmem [shape: f32[8,1], index: 1, kind: input, shape index: {}]
  %s2 = inlined_call_operand.hbm [shape: bf16[272,128], index: 2, kind: input, shape index: {}]
  %s3 = inlined_call_operand.vmem [shape: f32[8,128], index: 3, kind: input, shape index: {}]
  %s4 = inlined_call_operand.vmem [shape: f32[8,1], index: 4, kind: output, shape index: {}]
  %s5 = sld [smem:[#allocation0]]
  $region30: #{critic_forward.1} parent=0
    _
  %s7 = ssub.s32 1, %s5
  %s8 = scalar_select 0, %s7, %s5
  $region1: #{critic_forward.1} parent=0
    #allocation2 [shape = 'u8[69632]{0}', space=vmem, size = 0x11000, scoped, tag = 'input window, operand 2, single buffered']
    #allocation3 [shape = 's32[1]{0}', space=sflag, size = 0x4, scoped, tag = 'scoped memory for critic_forward.1']
    %9 = vsyncpa [#allocation3], 0
    // Predicated region
    $region2: #{critic_forward.1} parent=1 // pred_check
      _
    $region3: #{critic_forward.1} parent=1 // pred_check_branch
      %11 = sbr.rel (0) target = $region5
    $region4: #{critic_forward.1} parent=1 // pred_region
      _
    $region5: #{critic_forward.1} parent=1 // pred_fallthru
      _
    // Predicated region
    $region6: #{critic_forward.1} parent=1 // pred_check
      _
    $region7: #{critic_forward.1} parent=1 // pred_check_branch
      %13 = sbr.rel (0) target = $region9
    $region8: #{critic_forward.1} parent=1 // pred_region
      _
    $region9: #{critic_forward.1} parent=1 // pred_fallthru
      _
    // Predicated region
    $region10: #{critic_forward.1} parent=1 // pred_check
      _
    $region11: #{critic_forward.1} parent=1 // pred_check_branch
      %15 = sbr.rel (0) target = $region13
    $region12: #{critic_forward.1} parent=1 // pred_region
      %s17 = ssub.s32 2176, 2176
      %18 = vsyncadd [#allocation3], %s17
      %s19 = sshll.u32 [#allocation2], 4
      %s20 = int_to_ptr.vmem [resolvable:$true] %s19
      %25 = dma.hbm_to_vmem [thread:$0]  %s2, 2176, %s20, [#allocation3], 64, 64, 4
    $region13: #{critic_forward.1} parent=1 // pred_fallthru
      _
    // Predicated region
    $region14: #{critic_forward.1} parent=1 // pred_check
      _
    $region15: #{critic_forward.1} parent=1 // pred_check_branch
      %27 = sbr.rel (0) target = $region17
    $region16: #{critic_forward.1} parent=1 // pred_region
      _
    $region17: #{critic_forward.1} parent=1 // pred_fallthru
      _
    // Predicated region
    $region18: #{critic_forward.1} parent=1 // pred_check
      _
    $region19: #{critic_forward.1} parent=1 // pred_check_branch
      %29 = sbr.rel (0) target = $region21
    $region20: #{critic_forward.1} parent=1 // pred_region
      %30 = dma.done [#allocation3], 2176
    $region21: #{critic_forward.1} parent=1 // pred_fallthru
      _
    %v32 = vld [vmem:[%s0] sm:$0xff]
    %v33 = vld [vmem:[%s1] sm:$0xff]
    %v34 = vld [vmem:[%s3] sm:$0x1]
    %v35 = vld [vmem:[%s3 + $0x1] sm:$0x1]
    %v36 = vld [vmem:[%s3 + $0x2] sm:$0x1]
    %v37 = vld [vmem:[#allocation2] sm:$0xf]
    %v38 = vunpack.c.l.bf16 %v37
    %v39 = vlaneseq
    %v40 = vshrl.u32 %v39, 7
    %v41 = vsub.s32 0, %v40
    %v42 = vrot.slane %v34, %v41
    %44 = vset.pattern.permute.xlu0 0
    %45 = vperm.xlu0 %44, %v32
    %v46 = vpop.permute.xlu0 %45
    %v48 = vlaneseq
    %v49 = vshrl.u32 %v48, 7
    %v50 = vsub.s32 0, %v49
    %v51 = vrot.slane %v38, %v50
    %v52 = vmul.f32 %v46, %v51
    %v53 = vadd.f32 %v42, %v52
    %54 = vset.pattern.permute.xlu0 1
    %55 = vperm.xlu0 %54, %v32
    %v56 = vpop.permute.xlu0 %55
    %v58 = vlaneseq
    %v59 = vshrl.u32 %v58, 7
    %v60 = vsub.s32 1, %v59
    %v61 = vrot.slane %v38, %v60
    %v62 = vmul.f32 %v56, %v61
    %v63 = vadd.f32 %v53, %v62
    %64 = vset.pattern.permute.xlu0 2
    %65 = vperm.xlu0 %64, %v32
    %v66 = vpop.permute.xlu0 %65
    %v68 = vlaneseq
    %v69 = vshrl.u32 %v68, 7
    %v70 = vsub.s32 2, %v69
    %v71 = vrot.slane %v38, %v70
    %v72 = vmul.f32 %v66, %v71
    %v73 = vadd.f32 %v63, %v72
    %75 = vset.pattern.permute.xlu0 0
    %76 = vperm.xlu0 %75, %v33
    %v77 = vpop.permute.xlu0 %76
    %v79 = vlaneseq
    %v80 = vshrl.u32 %v79, 7
    %v81 = vsub.s32 3, %v80
    %v82 = vrot.slane %v38, %v81
    %v83 = vmul.f32 %v77, %v82
    %v84 = vadd.f32 %v73, %v83
    %v85 = vmax.f32 %v84, 0.0
    %v86 = vld [vmem:[#allocation2 + $0x8] sm:$0xf]
    %v87 = vld [vmem:[#allocation2 + $0xc] sm:$0xf]
    %v88 = vld [vmem:[#allocation2 + $0x10] sm:$0xf]
    %v89 = vld [vmem:[#allocation2 + $0x14] sm:$0xf]
    %v90 = vld [vmem:[#allocation2 + $0x18] sm:$0xf]
    %v91 = vld [vmem:[#allocation2 + $0x1c] sm:$0xf]
    %v92 = vld [vmem:[#allocation2 + $0x20] sm:$0xf]
    %v93 = vld [vmem:[#allocation2 + $0x24] sm:$0xf]
    %v94 = vld [vmem:[#allocation2 + $0x28] sm:$0xf]
    %v95 = vld [vmem:[#allocation2 + $0x2c] sm:$0xf]
    %v96 = vld [vmem:[#allocation2 + $0x30] sm:$0xf]
    %v97 = vld [vmem:[#allocation2 + $0x34] sm:$0xf]
    %v98 = vld [vmem:[#allocation2 + $0x38] sm:$0xf]
    %v99 = vld [vmem:[#allocation2 + $0x3c] sm:$0xf]
    %v100 = vld [vmem:[#allocation2 + $0x40] sm:$0xf]
    %v101 = vld [vmem:[#allocation2 + $0x44] sm:$0xf]
    %v102 = vld [vmem:[#allocation2 + $0x48] sm:$0xf]
    %v103 = vld [vmem:[#allocation2 + $0x4c] sm:$0xf]
    %v104 = vld [vmem:[#allocation2 + $0x50] sm:$0xf]
    %v105 = vld [vmem:[#allocation2 + $0x54] sm:$0xf]
    %v106 = vld [vmem:[#allocation2 + $0x58] sm:$0xf]
    %v107 = vld [vmem:[#allocation2 + $0x5c] sm:$0xf]
    %v108 = vld [vmem:[#allocation2 + $0x60] sm:$0xf]
    %v109 = vld [vmem:[#allocation2 + $0x64] sm:$0xf]
    %v110 = vld [vmem:[#allocation2 + $0x68] sm:$0xf]
    %v111 = vld [vmem:[#allocation2 + $0x6c] sm:$0xf]
    %v112 = vld [vmem:[#allocation2 + $0x70] sm:$0xf]
    %v113 = vld [vmem:[#allocation2 + $0x74] sm:$0xf]
    %v114 = vld [vmem:[#allocation2 + $0x78] sm:$0xf]
    %v115 = vld [vmem:[#allocation2 + $0x7c] sm:$0xf]
    %v116 = vld [vmem:[#allocation2 + $0x80] sm:$0xf]
    %v117 = vld [vmem:[#allocation2 + $0x84] sm:$0xf]
    %v118 = vpack.c.bf16 %v85, %v85
    %v119 = vlaneseq
    %v120 = vshrl.u32 %v119, 7
    %v121 = vsub.s32 0, %v120
    %v122 = vrot.slane %v35, %v121
    %v139 = vunpack.c.l.b16 %v86
    %v140 = vunpack.c.l.b16 %v87
    %v141 = vunpack.c.l.b16 %v88
    %v142 = vunpack.c.l.b16 %v89
    %v143 = vunpack.c.l.b16 %v90
    %v144 = vunpack.c.l.b16 %v91
    %v145 = vunpack.c.l.b16 %v92
    %v146 = vunpack.c.l.b16 %v93
    %v147 = vunpack.c.l.b16 %v94
    %v148 = vunpack.c.l.b16 %v95
    %v149 = vunpack.c.l.b16 %v96
    %v150 = vunpack.c.l.b16 %v97
    %v151 = vunpack.c.l.b16 %v98
    %v152 = vunpack.c.l.b16 %v99
    %v153 = vunpack.c.l.b16 %v100
    %v154 = vunpack.c.l.b16 %v101
    %v155 = vpack.c.b16 %v140, %v139
    %v156 = vpack.c.b16 %v142, %v141
    %v157 = vpack.c.b16 %v144, %v143
    %v158 = vpack.c.b16 %v146, %v145
    %v159 = vpack.c.b16 %v148, %v147
    %v160 = vpack.c.b16 %v150, %v149
    %v161 = vpack.c.b16 %v152, %v151
    %v162 = vpack.c.b16 %v154, %v153
    %171 = vmatprep.subr.bf16.mxu0 0
    %172 = vmatpush1.bf16.msra.mxu0 %v162
    %173 = vmatprep.subr.bf16.mxu0 0
    %174 = vmatpush1.bf16.msra.mxu0 %v161
    %175 = vmatprep.subr.bf16.mxu0 0
    %176 = vmatpush1.bf16.msra.mxu0 %v160
    %177 = vmatprep.subr.bf16.mxu0 0
    %178 = vmatpush1.bf16.msra.mxu0 %v159
    %179 = vmatprep.subr.bf16.mxu0 0
    %180 = vmatpush1.bf16.msra.mxu0 %v158
    %181 = vmatprep.subr.bf16.mxu0 0
    %182 = vmatpush1.bf16.msra.mxu0 %v157
    %183 = vmatprep.subr.bf16.mxu0 0
    %184 = vmatpush1.bf16.msra.mxu0 %v156
    %185 = vmatprep.subr.bf16.mxu0 0
    %186 = vmatpush1.bf16.msra.mxu0 %v155
    %187 = vmatprep.subr.bf16.mxu0 0
    %188 = vmatpush2.bf16.msra.mxu0 0
    %189 = vmatprep.subr.bf16.mxu0 0
    %190 = vmatpush2.bf16.msra.mxu0 0
    %191 = vmatprep.subr.bf16.mxu0 0
    %192 = vmatpush2.bf16.msra.mxu0 0
    %193 = vmatprep.subr.bf16.mxu0 0
    %194 = vmatpush2.bf16.msra.mxu0 0
    %195 = vmatprep.subr.bf16.mxu0 0
    %196 = vmatpush2.bf16.msra.mxu0 0
    %197 = vmatprep.subr.bf16.mxu0 0
    %198 = vmatpush2.bf16.msra.mxu0 0
    %199 = vmatprep.subr.bf16.mxu0 0
    %200 = vmatpush2.bf16.msra.mxu0 0
    %201 = vmatprep.subr.bf16.mxu0 0
    %202 = vmatpush2.bf16.msra.mxu0 0
    %203 = vmatprep.mubr.bf16.mxu0 0
    %204 = vmatmul.mubr.bf16.gmra.mxu0 %v118
    %v205 = vpop.f32.mrf.mxu0
    %v206 = vadd.f32 %v122, %v205
    %v207 = vpop.f32.mrf.mxu0
    %v208 = vpop.f32.mrf.mxu0
    %v209 = vpop.f32.mrf.mxu0
    %210 = vdwg.mxu0
    %v211 = vmax.f32 %v206, 0.0
    %v212 = vpack.c.bf16 %v211, %v211
    %v213 = vlaneseq
    %v214 = vshrl.u32 %v213, 7
    %v215 = vsub.s32 0, %v214
    %v216 = vrot.slane %v36, %v215
    %v233 = vunpack.c.l.b16 %v102
    %v234 = vunpack.c.l.b16 %v103
    %v235 = vunpack.c.l.b16 %v104
    %v236 = vunpack.c.l.b16 %v105
    %v237 = vunpack.c.l.b16 %v106
    %v238 = vunpack.c.l.b16 %v107
    %v239 = vunpack.c.l.b16 %v108
    %v240 = vunpack.c.l.b16 %v109
    %v241 = vunpack.c.l.b16 %v110
    %v242 = vunpack.c.l.b16 %v111
    %v243 = vunpack.c.l.b16 %v112
    %v244 = vunpack.c.l.b16 %v113
    %v245 = vunpack.c.l.b16 %v114
    %v246 = vunpack.c.l.b16 %v115
    %v247 = vunpack.c.l.b16 %v116
    %v248 = vunpack.c.l.b16 %v117
    %v249 = vpack.c.b16 %v234, %v233
    %v250 = vpack.c.b16 %v236, %v235
    %v251 = vpack.c.b16 %v238, %v237
    %v252 = vpack.c.b16 %v240, %v239
    %v253 = vpack.c.b16 %v242, %v241
    %v254 = vpack.c.b16 %v244, %v243
    %v255 = vpack.c.b16 %v246, %v245
    %v256 = vpack.c.b16 %v248, %v247
    %265 = vmatprep.subr.bf16.mxu0 0
    %266 = vmatpush1.bf16.msra.mxu0 %v256
    %267 = vmatprep.subr.bf16.mxu0 0
    %268 = vmatpush1.bf16.msra.mxu0 %v255
    %269 = vmatprep.subr.bf16.mxu0 0
    %270 = vmatpush1.bf16.msra.mxu0 %v254
    %271 = vmatprep.subr.bf16.mxu0 0
    %272 = vmatpush1.bf16.msra.mxu0 %v253
    %273 = vmatprep.subr.bf16.mxu0 0
    %274 = vmatpush1.bf16.msra.mxu0 %v252
    %275 = vmatprep.subr.bf16.mxu0 0
    %276 = vmatpush1.bf16.msra.mxu0 %v251
    %277 = vmatprep.subr.bf16.mxu0 0
    %278 = vmatpush1.bf16.msra.mxu0 %v250
    %279 = vmatprep.subr.bf16.mxu0 0
    %280 = vmatpush1.bf16.msra.mxu0 %v249
    %281 = vmatprep.subr.bf16.mxu0 0
    %282 = vmatpush2.bf16.msra.mxu0 0
    %283 = vmatprep.subr.bf16.mxu0 0
    %284 = vmatpush2.bf16.msra.mxu0 0
    %285 = vmatprep.subr.bf16.mxu0 0
    %286 = vmatpush2.bf16.msra.mxu0 0
    %287 = vmatprep.subr.bf16.mxu0 0
    %288 = vmatpush2.bf16.msra.mxu0 0
    %289 = vmatprep.subr.bf16.mxu0 0
    %290 = vmatpush2.bf16.msra.mxu0 0
    %291 = vmatprep.subr.bf16.mxu0 0
    %292 = vmatpush2.bf16.msra.mxu0 0
    %293 = vmatprep.subr.bf16.mxu0 0
    %294 = vmatpush2.bf16.msra.mxu0 0
    %295 = vmatprep.subr.bf16.mxu0 0
    %296 = vmatpush2.bf16.msra.mxu0 0
    %297 = vmatprep.mubr.bf16.mxu0 0
    %298 = vmatmul.mubr.bf16.gmra.mxu0 %v212
    %v299 = vpop.f32.mrf.mxu0
    %v300 = vadd.f32 %v216, %v299
    %v301 = vpop.f32.mrf.mxu0
    %v302 = vpop.f32.mrf.mxu0
    %v303 = vpop.f32.mrf.mxu0
    %304 = vdwg.mxu0
    %vm305 = vcmask 7168
    %306 = vst.msk [vmem:[%s4] sm:$0xff] %vm305, %v300
    // Predicated region
    $region22: #{critic_forward.1} parent=1 // pred_check
      _
    $region23: #{critic_forward.1} parent=1 // pred_check_branch
      %308 = sbr.rel (0) target = $region25
    $region24: #{critic_forward.1} parent=1 // pred_region
      _
    $region25: #{critic_forward.1} parent=1 // pred_fallthru
      _
    // Predicated region
    $region26: #{critic_forward.1} parent=1 // pred_check
      _
    $region27: #{critic_forward.1} parent=1 // pred_check_branch
      %310 = sbr.rel (0) target = $region29
    $region28: #{critic_forward.1} parent=1 // pred_region
      _
    $region29: #{critic_forward.1} parent=1 // pred_fallthru
      _
    %311 = vsyncpa [#allocation3], 1

</llo_original>
